<compile_context>
chip_gen: v5e
topology: v5e:2x2
jax: 0.10.0
libtpu: 0.0.40
codegen_flags: <defaults>
</compile_context>

<pallas_src>
import functools
import math

import jax
import jax.numpy as jnp
from jax import lax
from jax.experimental import pallas as pl
from jax.experimental.pallas import tpu as pltpu


# ----------------------------------------------------------------------------
# helpers
# ----------------------------------------------------------------------------
def _round_up(x, m):
    return ((x + m - 1) // m) * m


def _sublane(dtype):
    # min second-to-last tile dim: 8 for 4-byte, 16 for 2-byte, 32 for 1-byte
    return {4: 8, 2: 16, 1: 32}.get(jnp.dtype(dtype).itemsize, 8)


# ----------------------------------------------------------------------------
# Kernel 1: tiled matmul  out = x @ w.T   (w in torch nn.Linear layout [out, in])
# ----------------------------------------------------------------------------
def _matmul_nt_kernel(x_ref, w_ref, o_ref, acc_ref):
    # x_ref: [tm, tk], w_ref: [tn, tk], o_ref: [tm, tn], acc_ref: f32 [tm, tn]
    @pl.when(pl.program_id(2) == 0)
    def _():
        acc_ref[...] = jnp.zeros_like(acc_ref)

    acc_ref[...] += lax.dot_general(
        x_ref[...], w_ref[...],
        dimension_numbers=(((1,), (1,)), ((), ())),   # contract last axes (x @ w.T)
        preferred_element_type=jnp.float32)

    @pl.when(pl.program_id(2) == pl.num_programs(2) - 1)
    def _():
        o_ref[...] = acc_ref[...].astype(o_ref.dtype)


def linear_nt(x, w, *, max_tm=256, max_tn=256, max_tk=512):
    """x: [M, K], w: [N_out, K] (torch layout).  Returns x @ w.T : [M, N_out]."""
    M, K = x.shape
    n_out, k2 = w.shape
    assert K == k2, "in_features mismatch"
    sub = _sublane(x.dtype)

    tm = min(max_tm, _round_up(M, sub))
    tn = min(max_tn, _round_up(n_out, 128))
    tk = min(max_tk, _round_up(K, 128))
    mp, np_, kp = _round_up(M, tm), _round_up(n_out, tn), _round_up(K, tk)

    xp = x if (mp == M and kp == K) else jnp.pad(x, ((0, mp - M), (0, kp - K)))
    wp = w if (np_ == n_out and kp == K) else jnp.pad(w, ((0, np_ - n_out), (0, kp - K)))

    out = pl.pallas_call(
        _matmul_nt_kernel,
        out_shape=jax.ShapeDtypeStruct((mp, np_), x.dtype),
        grid_spec=pltpu.PrefetchScalarGridSpec(
            num_scalar_prefetch=0,
            grid=(mp // tm, np_ // tn, kp // tk),
            in_specs=[
                pl.BlockSpec((tm, tk), lambda i, j, k: (i, k)),
                pl.BlockSpec((tn, tk), lambda i, j, k: (j, k)),
            ],
            out_specs=pl.BlockSpec((tm, tn), lambda i, j, k: (i, j)),
            scratch_shapes=[pltpu.VMEM((tm, tn), jnp.float32)],
        ),
        compiler_params=pltpu.CompilerParams(
            dimension_semantics=("parallel", "parallel", "arbitrary")),
        cost_estimate=pl.CostEstimate(
            flops=2 * mp * np_ * kp,
            transcendentals=0,
            bytes_accessed=(mp * kp + np_ * kp + mp * np_) * jnp.dtype(x.dtype).itemsize),
    )(xp, wp)

    if (mp, np_) != (M, n_out):
        out = out[:M, :n_out]
    return out


# ----------------------------------------------------------------------------
# Kernel 2: RoPE application + head split -> [B, H, T, head_dim]
# ----------------------------------------------------------------------------
def _rope_split_heads_kernel(q_ref, k_ref, v_ref, qr_ref, kr_ref, cos_ref, sin_ref,
                             qo_ref, ko_ref, vo_ref, *, num_heads, head_dim, rotary_dim):
    cos = cos_ref[...].astype(jnp.float32)          # [tq, rot]
    sin = sin_ref[...].astype(jnp.float32)
    half = rotary_dim // 2

    def _rope(x):                                   # x: [tq, rot]
        x1 = x[:, :half]
        x2 = x[:, half:]
        return x * cos + jnp.concatenate([-x2, x1], axis=-1) * sin

    for h in range(num_heads):                      # static unrolled loop
        qr = qr_ref[0, :, h * rotary_dim:(h + 1) * rotary_dim].astype(jnp.float32)
        kr = kr_ref[0, :, h * rotary_dim:(h + 1) * rotary_dim].astype(jnp.float32)
        q_roped = _rope(qr)
        k_roped = _rope(kr)

        q_head = q_ref[0, :, h * head_dim:(h + 1) * head_dim].astype(jnp.float32)
        k_head = k_ref[0, :, h * head_dim:(h + 1) * head_dim].astype(jnp.float32)
        if rotary_dim < head_dim:
            q_out = jnp.concatenate([q_roped, q_head[:, rotary_dim:]], axis=-1)
            k_out = jnp.concatenate([k_roped, k_head[:, rotary_dim:]], axis=-1)
        else:
            q_out, k_out = q_roped, k_roped

        qo_ref[0, h, :, :] = q_out.astype(qo_ref.dtype)
        ko_ref[0, h, :, :] = k_out.astype(ko_ref.dtype)
        vo_ref[0, h, :, :] = v_ref[0, :, h * head_dim:(h + 1) * head_dim].astype(vo_ref.dtype)


def rope_split_heads(q_proj, k_proj, v_proj, q_rope, k_rope, cos, sin,
                     *, num_heads, head_dim, rotary_dim, block_t):
    B, t_pad, _ = q_proj.shape
    hd_all = num_heads * head_dim
    rot_all = num_heads * rotary_dim

    kernel = functools.partial(
        _rope_split_heads_kernel,
        num_heads=num_heads, head_dim=head_dim, rotary_dim=rotary_dim)

    tok_spec = lambda width: pl.BlockSpec((1, block_t, width), lambda b, i: (b, i, 0))
    head_spec = pl.BlockSpec((1, num_heads, block_t, head_dim), lambda b, i: (b, 0, i, 0))
    cs_spec = pl.BlockSpec((block_t, rotary_dim), lambda b, i: (i, 0))

    out_shape = tuple(
        jax.ShapeDtypeStruct((B, num_heads, t_pad, head_dim), q_proj.dtype)
        for _ in range(3))

    return pl.pallas_call(
        kernel,
        out_shape=out_shape,
        grid_spec=pltpu.PrefetchScalarGridSpec(
            num_scalar_prefetch=0,
            grid=(B, t_pad // block_t),
            in_specs=[tok_spec(hd_all), tok_spec(hd_all), tok_spec(hd_all),
                      tok_spec(rot_all), tok_spec(rot_all), cs_spec, cs_spec],
            out_specs=(head_spec, head_spec, head_spec),
        ),
        compiler_params=pltpu.CompilerParams(
            dimension_semantics=("parallel", "parallel")),
    )(q_proj, k_proj, v_proj, q_rope, k_rope, cos, sin)


# ----------------------------------------------------------------------------
# Kernel 3: causal flash attention (online softmax)
# ----------------------------------------------------------------------------
def _causal_flash_kernel(q_ref, k_ref, v_ref, o_ref, m_sc, l_sc, acc_sc,
                         *, scale, t_actual, tq, tkv):
    qi = pl.program_id(2)
    ki = pl.program_id(3)

    @pl.when(ki == 0)
    def _():
        m_sc[...] = jnp.full_like(m_sc, -jnp.inf)
        l_sc[...] = jnp.zeros_like(l_sc)
        acc_sc[...] = jnp.zeros_like(acc_sc)

    # skip kv blocks that are entirely above the causal diagonal
    @pl.when(ki * tkv <= qi * tq + (tq - 1))
    def _():
        q = q_ref[0, 0, :, :].astype(jnp.float32) * scale
        k = k_ref[0, 0, :, :].astype(jnp.float32)
        s = lax.dot_general(q, k, (((1,), (1,)), ((), ())),
                            preferred_element_type=jnp.float32)          # [tq, tkv]

        q_pos = qi * tq + lax.broadcasted_iota(jnp.int32, (tq, tkv), 0)
        k_pos = ki * tkv + lax.broadcasted_iota(jnp.int32, (tq, tkv), 1)
        mask = (k_pos <= q_pos) & (k_pos < t_actual)                     # causal + pad
        s = jnp.where(mask, s, -1e30)

        m_prev = m_sc[...]
        m_new = jnp.maximum(m_prev, s.max(axis=-1, keepdims=True))
        alpha = jnp.exp(m_prev - m_new)
        p = jnp.exp(s - m_new)
        l_sc[...] = alpha * l_sc[...] + p.sum(axis=-1, keepdims=True)
        acc_sc[...] = alpha * acc_sc[...] + jnp.dot(
            p, v_ref[0, 0, :, :].astype(jnp.float32),
            preferred_element_type=jnp.float32)
        m_sc[...] = m_new

    @pl.when(ki == pl.num_programs(3) - 1)
    def _():
        o_ref[0, 0, :, :] = (acc_sc[...] / l_sc[...]).astype(o_ref.dtype)


def causal_flash_attention(q, k, v, *, t_actual, block_q, block_kv):
    B, H, t_pad, head_dim = q.shape
    scale = 1.0 / math.sqrt(head_dim)

    kernel = functools.partial(_causal_flash_kernel, scale=scale,
                               t_actual=t_actual, tq=block_q, tkv=block_kv)

    q_spec = pl.BlockSpec((1, 1, block_q, head_dim), lambda b, h, qi, ki: (b, h, qi, 0))
    kv_spec = pl.BlockSpec((1, 1, block_kv, head_dim), lambda b, h, qi, ki: (b, h, ki, 0))

    return pl.pallas_call(
        kernel,
        out_shape=jax.ShapeDtypeStruct((B, H, t_pad, head_dim), q.dtype),
        grid_spec=pltpu.PrefetchScalarGridSpec(
            num_scalar_prefetch=0,
            grid=(B, H, t_pad // block_q, t_pad // block_kv),
            in_specs=[q_spec, kv_spec, kv_spec],
            out_specs=q_spec,
            scratch_shapes=[pltpu.VMEM((block_q, 1), jnp.float32),
                            pltpu.VMEM((block_q, 1), jnp.float32),
                            pltpu.VMEM((block_q, head_dim), jnp.float32)],
        ),
        compiler_params=pltpu.CompilerParams(
            dimension_semantics=("parallel", "parallel", "parallel", "arbitrary")),
    )(q, k, v)


# ----------------------------------------------------------------------------
# Full MLA forward (wrapper)
# ----------------------------------------------------------------------------
def mla_forward(x, params, *, num_heads, head_dim, rotary_dim, base, scaling_factor):
    B, T, hidden = x.shape
    assert num_heads * head_dim == hidden, "num_heads * head_dim must equal hidden_size"
    N = B * T
    x2d = x.reshape(N, hidden)

    # --- projections (tiled MXU matmuls, torch-layout weights, no transposes) ---
    kv_latent = linear_nt(x2d, params["kv_proj_d"])       # [N, latent]
    q_latent = linear_nt(x2d, params["q_proj_d"])         # [N, latent]
    k_full = linear_nt(kv_latent, params["k_proj_u"])     # [N, H*head_dim]
    q_full = linear_nt(q_latent, params["q_proj_u"])      # [N, H*head_dim]
    v_full = linear_nt(kv_latent, params["v_proj_u"])     # [N, H*head_dim]
    q_rope = linear_nt(q_latent, params["rope_q"])        # [N, H*rot]
    k_rope = linear_nt(x2d, params["rope_k"])             # [N, H*rot]

    # --- pad sequence length to a tile-friendly size (glue) ---
    block_t = min(128, _round_up(T, _sublane(x.dtype)))
    t_pad = _round_up(T, block_t)

    def to_padded_btd(a):
        a = a.reshape(B, T, a.shape[-1])
        if t_pad != T:
            a = jnp.pad(a, ((0, 0), (0, t_pad - T), (0, 0)))
        return a

    qf, kf, vf, qrb, krb = map(to_padded_btd, (q_full, k_full, v_full, q_rope, k_rope))

    # --- RoPE cos/sin tables (tiny, same math as the torch LatentAttention) ---
    inv_freq = 1.0 / (base ** (jnp.arange(0, rotary_dim, 2, dtype=jnp.float32) / rotary_dim))
    t_idx = jnp.arange(t_pad, dtype=jnp.float32)
    freqs = jnp.outer(t_idx, inv_freq)                         # [t_pad, rot/2]
    emb = jnp.concatenate([freqs, freqs], axis=-1)             # [t_pad, rot]
    cos = (jnp.cos(emb) * scaling_factor).astype(x.dtype)
    sin = (jnp.sin(emb) * scaling_factor).astype(x.dtype)

    # --- fused RoPE + head split -> [B, H, t_pad, head_dim] ---
    q_h, k_h, v_h = rope_split_heads(
        qf, kf, vf, qrb, krb, cos, sin,
        num_heads=num_heads, head_dim=head_dim, rotary_dim=rotary_dim, block_t=block_t)

    # --- causal flash attention ---
    y_h = causal_flash_attention(q_h, k_h, v_h, t_actual=T,
                                 block_q=block_t, block_kv=block_t)

    # --- merge heads (same as torch .transpose(1,2).contiguous().view) ---
    y = y_h[:, :, :T, :].transpose(0, 2, 1, 3).reshape(N, hidden)

    out = linear_nt(y, params["o_proj"])                       # [N, hidden]
    return out.reshape(B, T, hidden)


# ----------------------------------------------------------------------------
# Pure-JAX reference (mirrors the torch forward)
# ----------------------------------------------------------------------------
def mla_reference(x, params, *, num_heads, head_dim, rotary_dim, base, scaling_factor):
    B, T, hidden = x.shape
    hp = jax.lax.Precision.HIGHEST

    def lin(a, w):
        return jnp.einsum("...k,nk->...n", a, w, precision=hp)

    kv_latent = lin(x, params["kv_proj_d"])
    q_latent = lin(x, params["q_proj_d"])
    k = lin(kv_latent, params["k_proj_u"]).reshape(B, T, num_heads, head_dim).transpose(0, 2, 1, 3)
    q = lin(q_latent, params["q_proj_u"]).reshape(B, T, num_heads, head_dim).transpose(0, 2, 1, 3)
    v = lin(kv_latent, params["v_proj_u"]).reshape(B, T, num_heads, head_dim).transpose(0, 2, 1, 3)
    q_rot = lin(q_latent, params["rope_q"]).reshape(B, T, num_heads, rotary_dim).transpose(0, 2, 1, 3)
    k_rot = lin(x, params["rope_k"]).reshape(B, T, num_heads, rotary_dim).transpose(0, 2, 1, 3)

    inv_freq = 1.0 / (base ** (jnp.arange(0, rotary_dim, 2, dtype=jnp.float32) / rotary_dim))
    t_idx = jnp.arange(T, dtype=jnp.float32)
    emb = jnp.concatenate([jnp.outer(t_idx, inv_freq)] * 2, axis=-1)
    cos = jnp.cos(emb)[None, None] * scaling_factor
    sin = jnp.sin(emb)[None, None] * scaling_factor

    def rotate_half(a):
        half = a.shape[-1] // 2
        return jnp.concatenate([-a[..., half:], a[..., :half]], axis=-1)

    q_rot = q_rot * cos + rotate_half(q_rot) * sin
    k_rot = k_rot * cos + rotate_half(k_rot) * sin
    q = jnp.concatenate([q_rot, q[..., rotary_dim:]], axis=-1)
    k = jnp.concatenate([k_rot, k[..., rotary_dim:]], axis=-1)

    scale = 1.0 / math.sqrt(head_dim)
    s = jnp.einsum("bhqd,bhkd->bhqk", q, k, precision=hp) * scale
    causal = jnp.tril(jnp.ones((T, T), dtype=bool))
    s = jnp.where(causal[None, None], s, -jnp.inf)
    p = jax.nn.softmax(s, axis=-1)
    y = jnp.einsum("bhqk,bhkd->bhqd", p, v, precision=hp)
    y = y.transpose(0, 2, 1, 3).reshape(B, T, hidden)
    return lin(y, params["o_proj"])


def _init_linear_weight(key, out_features, in_features, dtype=jnp.float32):
    # torch.nn.Linear default init: U(-1/sqrt(in), 1/sqrt(in)), shape [out, in]
    bound = 1.0 / math.sqrt(in_features)
    return jax.random.uniform(key, (out_features, in_features), dtype=dtype,
                              minval=-bound, maxval=bound)


if __name__ == "__main__":
    batch, seq = 2, 8
    hidden, num_heads, head_dim = 32, 4, 8          # hidden == num_heads * head_dim
    rotary_dim = 4
    compression_ratio = 4
    latent_dim = hidden // compression_ratio
    base, scaling_factor = 10000.0, 1.0

    key = jax.random.PRNGKey(0)
    keys = jax.random.split(key, 9)
    x = jax.random.normal(keys[0], (batch, seq, hidden), dtype=jnp.float32)

    params = {
        "kv_proj_d": _init_linear_weight(keys[1], latent_dim, hidden),
        "q_proj_d": _init_linear_weight(keys[2], latent_dim, hidden),
        "k_proj_u": _init_linear_weight(keys[3], num_heads * head_dim, latent_dim),
        "q_proj_u": _init_linear_weight(keys[4], num_heads * head_dim, latent_dim),
        "v_proj_u": _init_linear_weight(keys[5], num_heads * head_dim, latent_dim),
        "rope_q": _init_linear_weight(keys[6], num_heads * rotary_dim, latent_dim),
        "rope_k": _init_linear_weight(keys[7], num_heads * rotary_dim, hidden),
        "o_proj": _init_linear_weight(keys[8], hidden, hidden),
    }

    out = mla_forward(x, params, num_heads=num_heads, head_dim=head_dim,
                      rotary_dim=rotary_dim, base=base, scaling_factor=scaling_factor)
    out = jax.block_until_ready(out)

    ref = mla_reference(x, params, num_heads=num_heads, head_dim=head_dim,
                        rotary_dim=rotary_dim, base=base, scaling_factor=scaling_factor)

    assert out.shape == (batch, seq, hidden)
    max_err = float(jnp.max(jnp.abs(out - ref)))
    assert jnp.allclose(out, ref, atol=1e-3, rtol=1e-3), f"mismatch vs reference (max abs err {max_err})"

    print("KERNEL_OK")
</pallas_src>

<mosaic_0001>
module attributes {stable_mosaic.version = 11 : i64} {
  func.func @_matmul_nt_kernel(%arg0: i32, %arg1: i32, %arg2: i32, %arg3: memref<16x128xf32, #tpu.memory_space<vmem>>, %arg4: memref<128x128xf32, #tpu.memory_space<vmem>>, %arg5: memref<16x128xf32, #tpu.memory_space<vmem>>, %arg6: memref<16x128xf32, #tpu.memory_space<vmem>>) attributes {dimension_semantics = [#tpu.dimension_semantics<parallel>, #tpu.dimension_semantics<parallel>, #tpu.dimension_semantics<arbitrary>], iteration_bounds = array<i64: 1, 1, 1>, scalar_prefetch = 0 : i64, scratch_operands = 1 : i64, tpu.core_type = #tpu.core_type<tc>, window_params = [{transform_indices = @transform_0, window_bounds = array<i64: 16, 128>}, {transform_indices = @transform_1, window_bounds = array<i64: 128, 128>}, {transform_indices = @transform_2, window_bounds = array<i64: 16, 128>}]} {
    %c0_i32 = arith.constant 0 : i32
    %0 = arith.cmpi eq, %arg2, %c0_i32 : i32
    %1 = arith.extui %0 : i1 to i32
    %c0_i32_0 = arith.constant 0 : i32
    %2 = arith.cmpi ne, %1, %c0_i32_0 : i32
    scf.if %2 {
      %cst_10 = arith.constant 0.000000e+00 : f32
      %12 = vector.broadcast %cst_10 : f32 to vector<16x128xf32>
      %c0_11 = arith.constant 0 : index
      %c0_12 = arith.constant 0 : index
      %13 = vector.load %arg6[%c0_11, %c0_12] : memref<16x128xf32, #tpu.memory_space<vmem>>, vector<16x128xf32>
      tpu.vector_store %arg6[%c0_11, %c0_12], %12 {strides = array<i32>} : memref<16x128xf32, #tpu.memory_space<vmem>>, vector<16x128xf32>,
    } else {
    }
    %c0 = arith.constant 0 : index
    %c0_1 = arith.constant 0 : index
    %3 = vector.load %arg6[%c0, %c0_1] : memref<16x128xf32, #tpu.memory_space<vmem>>, vector<16x128xf32>
    %c0_2 = arith.constant 0 : index
    %c0_3 = arith.constant 0 : index
    %4 = vector.load %arg3[%c0_2, %c0_3] : memref<16x128xf32, #tpu.memory_space<vmem>>, vector<16x128xf32>
    %c0_4 = arith.constant 0 : index
    %c0_5 = arith.constant 0 : index
    %5 = vector.load %arg4[%c0_4, %c0_5] : memref<128x128xf32, #tpu.memory_space<vmem>>, vector<128x128xf32>
    %cst = arith.constant dense<0.000000e+00> : vector<16x128xf32>
    %6 = tpu.matmul %4, %5, %cst {dimension_numbers = #tpu.dot_dimension_numbers<[1], [1], [0], [0], [0, 0, 1, 0], [], []>} : vector<16x128xf32>, vector<128x128xf32>, vector<16x128xf32> -> vector<16x128xf32>
    %7 = arith.addf %3, %6 : vector<16x128xf32>
    %c0_6 = arith.constant 0 : index
    %c0_7 = arith.constant 0 : index
    %8 = vector.load %arg6[%c0_6, %c0_7] : memref<16x128xf32, #tpu.memory_space<vmem>>, vector<16x128xf32>
    tpu.vector_store %arg6[%c0_6, %c0_7], %7 {strides = array<i32>} : memref<16x128xf32, #tpu.memory_space<vmem>>, vector<16x128xf32>,
    %c0_i32_8 = arith.constant 0 : i32
    %9 = arith.cmpi eq, %arg2, %c0_i32_8 : i32
    %10 = arith.extui %9 : i1 to i32
    %c0_i32_9 = arith.constant 0 : i32
    %11 = arith.cmpi ne, %10, %c0_i32_9 : i32
    scf.if %11 {
      %c0_10 = arith.constant 0 : index
      %c0_11 = arith.constant 0 : index
      %12 = vector.load %arg6[%c0_10, %c0_11] : memref<16x128xf32, #tpu.memory_space<vmem>>, vector<16x128xf32>
      %c0_12 = arith.constant 0 : index
      %c0_13 = arith.constant 0 : index
      %13 = vector.load %arg5[%c0_12, %c0_13] : memref<16x128xf32, #tpu.memory_space<vmem>>, vector<16x128xf32>
      tpu.vector_store %arg5[%c0_12, %c0_13], %12 {strides = array<i32>} : memref<16x128xf32, #tpu.memory_space<vmem>>, vector<16x128xf32>,
    } else {
    }
    return
  }
  func.func @transform_0(%arg0: i32, %arg1: i32, %arg2: i32) -> (i32, i32) {
    %c0_i32 = arith.constant 0 : i32
    return %arg0, %arg2 : i32, i32
  }
  func.func @transform_1(%arg0: i32, %arg1: i32, %arg2: i32) -> (i32, i32) {
    %c0_i32 = arith.constant 0 : i32
    return %arg1, %arg2 : i32, i32
  }
  func.func @transform_2(%arg0: i32, %arg1: i32, %arg2: i32) -> (i32, i32) {
    %c0_i32 = arith.constant 0 : i32
    return %arg0, %arg1 : i32, i32
  }
}

</mosaic_0001>

<llo_original>
// kernel: tpu_custom_call.1
$region0: #{tpu_custom_call.1}
  #allocation0 [shape = 'u32[]', space=smem, size = 0x4, offset = 0x4, fixed_abs, tag = 'smem constant byte address 0x4 - core index']
  #allocation1 [shape = 'u32[72,128]{1,0:T(1,128)}', space=vmem, size = 0x9000, scoped, tag = 'internal scratch']
  #allocation2 [shape = 'f32[16,128]{1,0:T(8,128)}', space=vmem, size = 0x2000, scoped, tag = 'scratch operand']
  %s0 = inlined_call_operand.hbm [shape: f32[16,128], index: 0, kind: input, shape index: {}]
  %s1 = inlined_call_operand.hbm [shape: f32[128,128], index: 1, kind: input, shape index: {}]
  %s2 = inlined_call_operand.hbm [shape: f32[16,128], index: 2, kind: output, shape index: {}]
  %s3 = sld [smem:[#allocation0]]
  $region34: #{tpu_custom_call.1} parent=0
    _
  %s5 = ssub.s32 1, %s3
  %s6 = scalar_select 0, %s5, %s3
  $region1: #{tpu_custom_call.1} parent=0
    #allocation3 [shape = 'u8[8192]{0}', space=vmem, size = 0x2000, scoped, tag = 'input window, operand 0, single buffered']
    #allocation4 [shape = 's32[1]{0}', space=sflag, size = 0x4, scoped, tag = 'scoped memory for tpu_custom_call.1']
    #allocation5 [shape = 's32[1]{0}', space=sflag, size = 0x4, scoped, tag = 'scoped memory for tpu_custom_call.1']
    #allocation6 [shape = 'u8[65536]{0}', space=vmem, size = 0x10000, scoped, tag = 'input window, operand 1, single buffered']
    #allocation7 [shape = 's32[1]{0}', space=sflag, size = 0x4, scoped, tag = 'scoped memory for tpu_custom_call.1']
    #allocation8 [shape = 'u8[8192]{0}', space=vmem, size = 0x2000, scoped, tag = 'output window, operand 0, single buffered']
    %7 = vsyncpa [#allocation4], 0
    %8 = vsyncpa [#allocation7], 0
    %9 = vsyncpa [#allocation5], 0
    // Predicated region
    $region2: #{tpu_custom_call.1} parent=1 // pred_check
      _
    $region3: #{tpu_custom_call.1} parent=1 // pred_check_branch
      %11 = sbr.rel (0) target = $region5
    $region4: #{tpu_custom_call.1} parent=1 // pred_region
      %13 = vsyncadd [#allocation4], 0
      %s14 = sshll.u32 %s0, 4
      %s15 = int_to_ptr.hbm [resolvable:$true] %s14
      %s16 = sshll.u32 [#allocation3], 4
      %s17 = int_to_ptr.vmem [resolvable:$true] %s16
      %22 = dma.hbm_to_vmem [thread:$0]  %s15, 256, %s17, [#allocation4], 128, 128, 8
    $region5: #{tpu_custom_call.1} parent=1 // pred_fallthru
      _
    // Predicated region
    $region6: #{tpu_custom_call.1} parent=1 // pred_check
      _
    $region7: #{tpu_custom_call.1} parent=1 // pred_check_branch
      %24 = sbr.rel (0) target = $region9
    $region8: #{tpu_custom_call.1} parent=1 // pred_region
      %26 = vsyncadd [#allocation7], 0
      %s27 = sshll.u32 %s1, 4
      %s28 = int_to_ptr.hbm [resolvable:$true] %s27
      %s29 = sshll.u32 [#allocation6], 4
      %s30 = int_to_ptr.vmem [resolvable:$true] %s29
      %35 = dma.hbm_to_vmem [thread:$0]  %s28, 2048, %s30, [#allocation7], 128, 128, 8
    $region9: #{tpu_custom_call.1} parent=1 // pred_fallthru
      _
    // Predicated region
    $region10: #{tpu_custom_call.1} parent=1 // pred_check
      _
    $region11: #{tpu_custom_call.1} parent=1 // pred_check_branch
      %37 = sbr.rel (0) target = $region13
    $region12: #{tpu_custom_call.1} parent=1 // pred_region
      %39 = dma.done [#allocation4], 256
    $region13: #{tpu_custom_call.1} parent=1 // pred_fallthru
      _
    // Predicated region
    $region14: #{tpu_custom_call.1} parent=1 // pred_check
      _
    $region15: #{tpu_custom_call.1} parent=1 // pred_check_branch
      %41 = sbr.rel (0) target = $region17
    $region16: #{tpu_custom_call.1} parent=1 // pred_region
      %43 = dma.done [#allocation7], 2048
    $region17: #{tpu_custom_call.1} parent=1 // pred_fallthru
      _
    %p44 = scmp.eq.s32.totalorder 0, 0
    // Predicated region
    $region18: #{tpu_custom_call.1} parent=1 // pred_check
      %p45 = pneg %p44
    $region19: #{tpu_custom_call.1} parent=1 // pred_check_branch
      %47 = sbr.rel (%p45) target = $region21
    $region20: #{tpu_custom_call.1} parent=1 // pred_region
      %48 = vst [vmem:[#allocation2] sm:$0xff] 0.0
      %49 = vst [vmem:[#allocation2 + $0x8] sm:$0xff] 0.0
    $region21: #{tpu_custom_call.1} parent=1 // pred_fallthru
      _
    %v50 = vld [vmem:[#allocation2] sm:$0xff]
    %v51 = vld [vmem:[#allocation2 + $0x8] sm:$0xff]
    %v52 = vld [vmem:[#allocation3] sm:$0xff]
    %v53 = vld [vmem:[#allocation3 + $0x8] sm:$0xff]
    %v54 = vld [vmem:[#allocation6] sm:$0xff]
    %v55 = vld [vmem:[#allocation6 + $0x8] sm:$0xff]
    %v56 = vld [vmem:[#allocation6 + $0x10] sm:$0xff]
    %v57 = vld [vmem:[#allocation6 + $0x18] sm:$0xff]
    %v58 = vld [vmem:[#allocation6 + $0x20] sm:$0xff]
    %v59 = vld [vmem:[#allocation6 + $0x28] sm:$0xff]
    %v60 = vld [vmem:[#allocation6 + $0x30] sm:$0xff]
    %v61 = vld [vmem:[#allocation6 + $0x38] sm:$0xff]
    %v62 = vld [vmem:[#allocation6 + $0x40] sm:$0xff]
    %v63 = vld [vmem:[#allocation6 + $0x48] sm:$0xff]
    %v64 = vld [vmem:[#allocation6 + $0x50] sm:$0xff]
    %v65 = vld [vmem:[#allocation6 + $0x58] sm:$0xff]
    %v66 = vld [vmem:[#allocation6 + $0x60] sm:$0xff]
    %v67 = vld [vmem:[#allocation6 + $0x68] sm:$0xff]
    %v68 = vld [vmem:[#allocation6 + $0x70] sm:$0xff]
    %v69 = vld [vmem:[#allocation6 + $0x78] sm:$0xff]
    %70 = vmatpush.xpose.msra.mxu0 %v69
    %71 = vmatpush.xpose.msra.mxu0 %v68
    %72 = vmatpush.xpose.msra.mxu0 %v67
    %73 = vmatpush.xpose.msra.mxu0 %v66
    %74 = vmatpush.xpose.msra.mxu0 %v65
    %75 = vmatpush.xpose.msra.mxu0 %v64
    %76 = vmatpush.xpose.msra.mxu0 %v63
    %77 = vmatpush.xpose.msra.mxu0 %v62
    %78 = vmatpush.xpose.msra.mxu0 %v61
    %79 = vmatpush.xpose.msra.mxu0 %v60
    %80 = vmatpush.xpose.msra.mxu0 %v59
    %81 = vmatpush.xpose.msra.mxu0 %v58
    %82 = vmatpush.xpose.msra.mxu0 %v57
    %83 = vmatpush.xpose.msra.mxu0 %v56
    %84 = vmatpush.xpose.msra.mxu0 %v55
    %85 = vmatpush.xpose.msra.mxu0 %v54
    %86 = vmatmul.f32.gmra.mxu0 %v52
    %v87 = vpop.f32.mrf.mxu0
    %v88 = vadd.f32 0.0, %v87
    %89 = vmatmul.f32.gmra.mxu0 %v53
    %v90 = vpop.f32.mrf.mxu0
    %v91 = vadd.f32 0.0, %v90
    %92 = vdwg.mxu0
    %v93 = vadd.f32 %v50, %v88
    %v94 = vadd.f32 %v51, %v91
    %95 = vst [vmem:[#allocation2] sm:$0xff] %v93
    %96 = vst [vmem:[#allocation2 + $0x8] sm:$0xff] %v94
    // Predicated region
    $region22: #{tpu_custom_call.1} parent=1 // pred_check
      %p97 = pneg %p44
    $region23: #{tpu_custom_call.1} parent=1 // pred_check_branch
      %99 = sbr.rel (%p97) target = $region25
    $region24: #{tpu_custom_call.1} parent=1 // pred_region
      %v100 = vld [vmem:[#allocation2] sm:$0xff]
      %v101 = vld [vmem:[#allocation2 + $0x8] sm:$0xff]
      %102 = vst [vmem:[#allocation8] sm:$0xff] %v100
      %103 = vst [vmem:[#allocation8 + $0x8] sm:$0xff] %v101
    $region25: #{tpu_custom_call.1} parent=1 // pred_fallthru
      _
    // Predicated region
    $region26: #{tpu_custom_call.1} parent=1 // pred_check
      _
    $region27: #{tpu_custom_call.1} parent=1 // pred_check_branch
      %105 = sbr.rel (0) target = $region29
    $region28: #{tpu_custom_call.1} parent=1 // pred_region
      %107 = vsyncadd [#allocation5], 0
      %s108 = sshll.u32 [#allocation8], 4
      %s109 = int_to_ptr.vmem [resolvable:$true] %s108
      %s110 = sshll.u32 %s2, 4
      %s111 = int_to_ptr.hbm [resolvable:$true] %s110
      %116 = dma.vmem_to_hbm [thread:$0]  %s109, 256, %s111, [#allocation5], 128, 128, 8
    $region29: #{tpu_custom_call.1} parent=1 // pred_fallthru
      _
    // Predicated region
    $region30: #{tpu_custom_call.1} parent=1 // pred_check
      _
    $region31: #{tpu_custom_call.1} parent=1 // pred_check_branch
      %118 = sbr.rel (0) target = $region33
    $region32: #{tpu_custom_call.1} parent=1 // pred_region
      %120 = dma.done [#allocation5], 256
    $region33: #{tpu_custom_call.1} parent=1 // pred_fallthru
      _
    %121 = vsyncpa [#allocation4], 1
    %122 = vsyncpa [#allocation7], 1
    %123 = vsyncpa [#allocation5], 1

</llo_original>
